<compile_context>
chip_gen: v7x
topology: tpu7x:2x2x1
jax: 0.10.0
libtpu: 0.0.40
codegen_flags: <defaults>
</compile_context>

<pallas_src>
import jax
import jax.numpy as jnp
from jax.experimental import pallas as pl
from jax.experimental.pallas import tpu as pltpu


def _copy_kernel(x_ref, o_ref):
    # Pure passthrough of the current tile.
    o_ref[...] = x_ref[...]


def _sublane_rows(dtype):
    """Minimum second-to-last block granularity for this dtype."""
    itemsize = jnp.dtype(dtype).itemsize
    return {4: 8, 2: 16, 1: 32}.get(itemsize, 8)


def _default_block_bytes():
    """Generation-conditional block-size target for the copy kernel."""
    kind = ""
    try:
        kind = jax.devices()[0].device_kind.lower()
    except Exception:
        pass
    if "v5" in kind:
        # v5e scoped-VMEM default is 16 MiB; 4 x 2 MiB = 8 MiB fits with room,
        # and at ~820 GB/s HBM the per-step overhead is already only ~5-7%.
        return 2 * 1024 * 1024
    # v6e / v7x: 6 MiB blocks => 24 MiB double-buffered in+out, under the
    # 32 MiB scoped default (set explicitly below) and v7x's 64 MiB physical.
    return 6 * 1024 * 1024


def identity_copy_pallas(x, block_bytes=None):
    """Explicit materialized copy of `x` through a Pallas kernel.

    Not used on the module's hot path (Empty returns its inputs directly);
    provided for callers that genuinely need a fresh buffer.
    `block_bytes` overrides the per-generation block-size target (testing).
    """
    n = x.size
    if n == 0:
        return x

    itemsize = jnp.dtype(x.dtype).itemsize
    sub = _sublane_rows(x.dtype)
    orig_shape = x.shape

    if block_bytes is None:
        block_bytes = _default_block_bytes()
    # Raise the scoped-VMEM limit explicitly only when the double-buffered
    # footprint could exceed a conservative 12 MiB (keeps v5e's 16 MiB default
    # untouched for small blocks).
    vmem_limit = 32 * 1024 * 1024 if 4 * block_bytes > 12 * 1024 * 1024 else None
    # Pure memory traffic: read n*itemsize, write n*itemsize, zero flops.
    cost = pl.CostEstimate(
        flops=0, transcendentals=0, bytes_accessed=2 * n * itemsize
    )

    # Pick the widest lane-dense last dim that divides n (no padding copies;
    # reshape of a contiguous array is layout plumbing, not an HBM pass).
    C = None
    for lanes in (4096, 2048, 1024, 512, 256, 128):
        if n % lanes == 0:
            C = lanes
            break

    if C is not None:
        # Lane-dense 2D tiled path.  Block rows are a multiple of the dtype's
        # sublane granularity (or the full extent when R is small); the cdiv
        # grid's partial last row-block is masked by Pallas.
        R = n // C
        x2d = x.reshape(R, C)
        bytes_per_row = C * itemsize
        target_rows = max(sub, block_bytes // bytes_per_row)
        tr = min(R, (target_rows // sub) * sub)
        grid = (pl.cdiv(R, tr),)

        y2d = pl.pallas_call(
            _copy_kernel,
            out_shape=jax.ShapeDtypeStruct((R, C), x2d.dtype),
            grid_spec=pltpu.PrefetchScalarGridSpec(
                num_scalar_prefetch=0,
                grid=grid,
                in_specs=[pl.BlockSpec((tr, C), lambda i: (i, 0))],
                out_specs=pl.BlockSpec((tr, C), lambda i: (i, 0)),
            ),
            compiler_params=pltpu.CompilerParams(
                # No-op on single-TC chips; on v7x shards the copy grid across
                # both TensorCores so both can drive HBM.
                dimension_semantics=("parallel",),
                vmem_limit_bytes=vmem_limit,
            ),
            cost_estimate=cost,
        )(x2d)
        return y2d.reshape(orig_shape)

    # n is not a multiple of 128.
    blk = max(1024, (block_bytes // itemsize) // 1024 * 1024)

    if n <= blk:
        # Small odd-shaped array: single block equal to the full array dims
        # (legal regardless of the (8,128) divisibility rule, and well under
        # every generation's scoped-VMEM budget at these sizes).
        return pl.pallas_call(
            _copy_kernel,
            out_shape=jax.ShapeDtypeStruct(x.shape, x.dtype),
            compiler_params=pltpu.CompilerParams(vmem_limit_bytes=vmem_limit),
            cost_estimate=cost,
        )(x)

    # Large odd-shaped array: view as (1, n) and tile along lanes.  Block
    # width is a multiple of 1024 elements (>= one f32 vreg row of sublanes),
    # so the block satisfies the lane-divisibility rule; the partial tail
    # block is masked by Pallas.  This keeps double-buffered pipelining and
    # avoids the whole-array-in-one-block VMEM hazard (critical on v7x).
    x1 = x.reshape(1, n)
    grid = (pl.cdiv(n, blk),)
    y1 = pl.pallas_call(
        _copy_kernel,
        out_shape=jax.ShapeDtypeStruct((1, n), x.dtype),
        grid_spec=pltpu.PrefetchScalarGridSpec(
            num_scalar_prefetch=0,
            grid=grid,
            in_specs=[pl.BlockSpec((1, blk), lambda i: (0, i))],
            out_specs=pl.BlockSpec((1, blk), lambda i: (0, i)),
        ),
        compiler_params=pltpu.CompilerParams(
            dimension_semantics=("parallel",),
            vmem_limit_bytes=vmem_limit,
        ),
        cost_estimate=cost,
    )(x1)
    return y1.reshape(orig_shape)


class EmptyPallas:
    """JAX/Pallas equivalent of the PyTorch `Empty` module.

    Identity / passthrough: no kernel is launched on the forward path because
    the op moves zero bytes by definition.
    """

    def __init__(self, *args, **kwargs):
        # No parameters.
        pass

    def __call__(self, *args, **kwargs):
        if len(args) == 1:
            return args[0]
        elif len(args) == 0:
            return None
        return tuple(args)


if __name__ == "__main__":
    key = jax.random.PRNGKey(0)
    k1, k2, k3, k4, k5 = jax.random.split(key, 5)

    # Small NCHW-like input consistent with typical usage of Empty as a
    # drop-in no-op layer.
    x = jax.random.normal(key, (2, 4, 16, 16), dtype=jnp.float32)

    mod = EmptyPallas()

    # 1-arg case: identity (zero-copy passthrough -- the module's hot path).
    y = jax.block_until_ready(mod(x))
    assert y.shape == x.shape and y.dtype == x.dtype
    assert bool(jnp.all(y == x))

    # 0-arg case: None.
    assert mod() is None

    # multi-arg case: tuple passthrough (no kernels launched).
    a = jax.random.normal(k1, (8, 32), dtype=jnp.float32)
    b = jax.random.normal(k2, (2, 4, 8, 8), dtype=jnp.float32)
    out = jax.block_until_ready(mod(a, b))
    assert isinstance(out, tuple) and len(out) == 2
    assert bool(jnp.all(out[0] == a)) and bool(jnp.all(out[1] == b))

    # Exercise every code path of the optional Pallas copy kernel:
    # 1) lane-dense 2D tiled path, single grid step (n=2048 -> (1, 2048)).
    xc = jax.block_until_ready(identity_copy_pallas(x))
    assert xc.shape == x.shape and xc.dtype == x.dtype
    assert bool(jnp.all(xc == x))

    # 1b) same path in bf16 (exercises packed-dtype block selection).
    xb = x.astype(jnp.bfloat16)
    xbc = jax.block_until_ready(identity_copy_pallas(xb))
    assert xbc.dtype == jnp.bfloat16 and bool(jnp.all(xbc == xb))

    # 2) 2D tiled path with a multi-step grid and a masked partial last
    #    row-block (R=17 rows, tr=8 -> grid=(3,)), via a tiny block override.
    m = jax.random.normal(k3, (17, 1024), dtype=jnp.float32)
    mc = jax.block_until_ready(identity_copy_pallas(m, block_bytes=4096))
    assert bool(jnp.all(mc == m))

    # 3) large odd-sized fallback: n=3000 (not a multiple of 128) -> (1, n)
    #    lane-tiled path with a masked partial tail block.
    f = jax.random.normal(k4, (3000,), dtype=jnp.float32)
    fc = jax.block_until_ready(identity_copy_pallas(f, block_bytes=4096))
    assert bool(jnp.all(fc == f))

    # 4) small odd-shaped single full-array block fallback.
    s = jax.random.normal(k5, (7, 9), dtype=jnp.float32)
    sc = jax.block_until_ready(identity_copy_pallas(s))
    assert bool(jnp.all(sc == s))

    print("KERNEL_OK")
</pallas_src>

<mosaic_0001>
module attributes {stable_mosaic.version = 11 : i64} {
  func.func @_copy_kernel(%arg0: i32, %arg1: memref<1x2048xf32, #tpu.memory_space<vmem>>, %arg2: memref<1x2048xf32, #tpu.memory_space<vmem>>) attributes {dimension_semantics = [#tpu.dimension_semantics<parallel>], iteration_bounds = array<i64: 1>, scalar_prefetch = 0 : i64, scratch_operands = 0 : i64, tpu.core_type = #tpu.core_type<tc>, window_params = [{transform_indices = @transform_0, window_bounds = array<i64: 1, 2048>}, {transform_indices = @transform_1, window_bounds = array<i64: 1, 2048>}]} {
    %c0 = arith.constant 0 : index
    %c0_0 = arith.constant 0 : index
    %0 = vector.load %arg1[%c0, %c0_0] : memref<1x2048xf32, #tpu.memory_space<vmem>>, vector<1x2048xf32>
    %c0_1 = arith.constant 0 : index
    %c0_2 = arith.constant 0 : index
    %1 = vector.load %arg2[%c0_1, %c0_2] : memref<1x2048xf32, #tpu.memory_space<vmem>>, vector<1x2048xf32>
    tpu.vector_store %arg2[%c0_1, %c0_2], %0 {strides = array<i32>} : memref<1x2048xf32, #tpu.memory_space<vmem>>, vector<1x2048xf32>,
    return
  }
  func.func @transform_0(%arg0: i32) -> (i32, i32) {
    %c0_i32 = arith.constant 0 : i32
    %c0_i32_0 = arith.constant 0 : i32
    return %arg0, %c0_i32 : i32, i32
  }
  func.func @transform_1(%arg0: i32) -> (i32, i32) {
    %c0_i32 = arith.constant 0 : i32
    %c0_i32_0 = arith.constant 0 : i32
    return %arg0, %c0_i32 : i32, i32
  }
}

</mosaic_0001>

<llo_original>
// kernel: tpu_custom_call.1
$region0: #{tpu_custom_call.1}
  #allocation0 [shape = 'u32[]', space=smem, size = 0x4, offset = 0x4, fixed_abs, tag = 'smem constant byte address 0x4 - core index']
  #allocation1 [shape = 'u32[144,128]{1,0:T(1,128)}', space=vmem, size = 0x12000, scoped, tag = 'internal scratch']
  %s0 = inlined_call_operand.hbm [shape: f32[1,2048], index: 0, kind: input, shape index: {}]
  %s1 = inlined_call_operand.hbm [shape: f32[1,2048], index: 1, kind: output, shape index: {}]
  %s2 = sld [smem:[#allocation0]]
  $region18: #{tpu_custom_call.1} parent=0
    _
  %s4 = ssub.s32 1, %s2
  %s5 = scalar_select 0, %s4, %s2
  $region1: #{tpu_custom_call.1} parent=0
    #allocation2 [shape = 'u8[8192]{0}', space=vmem, size = 0x2000, scoped, tag = 'input window, operand 0, single buffered']
    #allocation3 [shape = 's32[1]{0}', space=sflag, size = 0x4, scoped, tag = 'scoped memory for tpu_custom_call.1']
    #allocation4 [shape = 's32[1]{0}', space=sflag, size = 0x4, scoped, tag = 'scoped memory for tpu_custom_call.1']
    #allocation5 [shape = 'u8[8192]{0}', space=vmem, size = 0x2000, scoped, tag = 'output window, operand 0, single buffered']
    %6 = vsyncpa [#allocation3], 0
    %7 = vsyncpa [#allocation4], 0
    // Predicated region
    $region2: #{tpu_custom_call.1} parent=1 // pred_check
      _
    $region3: #{tpu_custom_call.1} parent=1 // pred_check_branch
      %9 = sbr.rel (0) target = $region5
    $region4: #{tpu_custom_call.1} parent=1 // pred_region
      %s11 = ssub.s32 256, 256
      %12 = vsyncadd [#allocation3], %s11
      %s14 = sshll.u32 [#allocation2], 4
      %s15 = int_to_ptr.vmem [resolvable:$true] %s14
      %17 = dma.hbm_to_vmem [thread:$0]  %s0, 256, %s15, [#allocation3]
    $region5: #{tpu_custom_call.1} parent=1 // pred_fallthru
      _
    // Predicated region
    $region6: #{tpu_custom_call.1} parent=1 // pred_check
      _
    $region7: #{tpu_custom_call.1} parent=1 // pred_check_branch
      %19 = sbr.rel (0) target = $region9
    $region8: #{tpu_custom_call.1} parent=1 // pred_region
      %20 = dma.done [#allocation3], 256
    $region9: #{tpu_custom_call.1} parent=1 // pred_fallthru
      _
    %v21 = vld [vmem:[#allocation2] sm:$0xff]
    %v22 = vld [vmem:[#allocation2 + $0x8] sm:$0xff]
    %23 = vst [vmem:[#allocation5] sm:$0xff] %v21
    %24 = vst [vmem:[#allocation5 + $0x8] sm:$0xff] %v22
    // Predicated region
    $region10: #{tpu_custom_call.1} parent=1 // pred_check
      _
    $region11: #{tpu_custom_call.1} parent=1 // pred_check_branch
      %26 = sbr.rel (0) target = $region13
    $region12: #{tpu_custom_call.1} parent=1 // pred_region
      %s28 = ssub.s32 256, 256
      %29 = vsyncadd [#allocation4], %s28
      %s31 = sshll.u32 [#allocation5], 4
      %s32 = int_to_ptr.vmem [resolvable:$true] %s31
      %34 = dma.vmem_to_hbm [thread:$0]  %s32, 256, %s1, [#allocation4]
    $region13: #{tpu_custom_call.1} parent=1 // pred_fallthru
      _
    // Predicated region
    $region14: #{tpu_custom_call.1} parent=1 // pred_check
      _
    $region15: #{tpu_custom_call.1} parent=1 // pred_check_branch
      %36 = sbr.rel (0) target = $region17
    $region16: #{tpu_custom_call.1} parent=1 // pred_region
      %37 = dma.done [#allocation4], 256
    $region17: #{tpu_custom_call.1} parent=1 // pred_fallthru
      _
    %38 = vsyncpa [#allocation3], 1
    %39 = vsyncpa [#allocation4], 1

</llo_original>
